<compile_context>
chip_gen: v5e
topology: v5e:2x2
jax: 0.10.0
libtpu: 0.0.40
codegen_flags: <defaults>
</compile_context>

<pallas_src>
import functools

import jax
import jax.numpy as jnp
from jax.experimental import pallas as pl
from jax.experimental.pallas import tpu as pltpu


def _proj_kernel(x_ref, wkv_ref, bkv_ref, wq_ref, bq_ref, kv_ref, q_ref):
    """Fused 1x1-conv projections for one (batch, HW-tile) block.

    kv rows: [0, Cq) key, [Cq, Cq+C) value, row Cq+C all-ones (denominator helper).
    """
    x = x_ref[...].astype(jnp.bfloat16)                      # (C, tp)
    kv = jax.lax.dot_general(
        wkv_ref[...], x, (((1,), (0,)), ((), ())),
        preferred_element_type=jnp.float32) + bkv_ref[...]   # (Cq+C+1, tp)
    q = jax.lax.dot_general(
        wq_ref[...], x, (((1,), (0,)), ((), ())),
        preferred_element_type=jnp.float32) + bq_ref[...]    # (Cq, tp)
    kv_ref[...] = kv.astype(kv_ref.dtype)
    q_ref[...] = q.astype(q_ref.dtype)


def _attn_kernel(q_ref, kv_ref, x_ref, o_ref, acc_ref, m_ref, *, C, Cq, bf16_exp):
    """Online-softmax attention: one (batch, q-tile) output, one kv-tile step."""
    ki = pl.program_id(2)

    @pl.when(ki == 0)
    def _():
        m_ref[...] = jnp.full_like(m_ref, -jnp.inf)
        acc_ref[...] = jnp.zeros_like(acc_ref)

    kv = kv_ref[...]                                          # (Cq+C+1, tk) bf16
    k = kv[:Cq, :]                                            # (Cq, tk)
    v_aug = kv[Cq:, :]                                        # (C+1, tk)  value + ones row
    q = q_ref[...]                                            # (Cq, tq) bf16

    # s[j, i] = k[:, j] . q[:, i]  -> query index i stays lane-dense.
    s = jax.lax.dot_general(
        k, q, (((0,), (0,)), ((), ())),
        preferred_element_type=jnp.float32)                   # (tk, tq)

    m_prev = m_ref[...]                                       # (1, tq)
    m_new = jnp.maximum(m_prev, jnp.max(s, axis=0, keepdims=True))
    alpha = jnp.exp(m_prev - m_new)                           # (1, tq); 0 on first step
    if bf16_exp:                                              # v6e/v7x: bf16 EUP
        p = jnp.exp((s - m_new).astype(jnp.bfloat16))         # (tk, tq) bf16
    else:                                                     # v5e & older: f32 EUP only
        p = jnp.exp(s - m_new).astype(jnp.bfloat16)

    # acc[c, i] <- alpha * acc + sum_j v_aug[c, j] p[j, i]; last row = denominator.
    acc_ref[...] = acc_ref[...] * alpha + jax.lax.dot_general(
        v_aug, p, (((1,), (0,)), ((), ())),
        preferred_element_type=jnp.float32)                   # (C+1, tq)
    m_ref[...] = m_new

    @pl.when(ki == pl.num_programs(2) - 1)
    def _():
        acc = acc_ref[...]
        # Denominator >= 1 (running max subtracted) -> approx reciprocal is safe.
        inv_l = pl.reciprocal(acc[C:C + 1, :], approx=True)   # (1, tq)
        o_ref[...] = (acc[:C, :] * inv_l
                      + x_ref[...].astype(jnp.float32)).astype(o_ref.dtype)


def _device_tuning(hw):
    """Per-generation query/key tile cap and bf16-exp availability."""
    kind = ""
    try:
        kind = jax.devices()[0].device_kind.lower()
    except Exception:
        pass
    old_gen = any(v in kind for v in ("v2", "v3", "v4", "v5"))
    if "v7" in kind:
        cap = 128 if hw >= 8192 else 256    # 64 MiB VMEM part: bound the score block
    elif old_gen:
        cap = 256                           # v5e: 16 MiB scoped default, 1 vst slot
    else:
        cap = 512                           # v6e and unknown/newer
    return cap, not old_gen


def _pick_tile(hw, cap):
    if hw % 128 == 0:
        for cand in (512, 256, 128):
            if cand <= cap and hw % cand == 0:
                return cand
    # TODO(synk): pad HW to a multiple of 128 in the wrapper instead of a
    #             full-extent (masked-store) tile for ragged spatial sizes.
    return hw


def attention_module(x_nchw, wq, bq, wk, bk, wv, bv, *, tq=None, tk=None):
    """x_nchw: (B, C, H, W); wq/wk: (C, C//8); wv: (C, C); biases: (1, Cout)."""
    B, C, H, W = x_nchw.shape
    HW = H * W
    Cq = wq.shape[1]
    Ckv = Cq + C + 1

    cap, bf16_exp = _device_tuning(HW)
    tq = _pick_tile(HW, cap) if tq is None else tq
    tk = _pick_tile(HW, cap) if tk is None else tk
    assert HW % tq == 0 and HW % tk == 0

    # Channel-first flatten — a free reshape (no NCHW<->NHWC transposes).
    x_cf = x_nchw.reshape(B, C, HW)

    # Pre-transposed bf16 projection weights (Cout, Cin); key + value + ones fused.
    w_kv = jnp.concatenate(
        [wk.T, wv.T, jnp.zeros((1, C), wv.dtype)], axis=0).astype(jnp.bfloat16)
    b_kv = jnp.concatenate(
        [bk.T, bv.T, jnp.ones((1, 1), bv.dtype)], axis=0).astype(jnp.float32)
    w_q = wq.T.astype(jnp.bfloat16)                           # (Cq, C)
    b_q = bq.T.astype(jnp.float32)                            # (Cq, 1)

    vmem_limit = 32 * 1024 * 1024  # explicit, within every generation's budget

    # ---- Pass 1: projections computed ONCE per position (hoisted out of the
    #      query-tile loop), stored bf16 and lane-dense in HW. ----
    tp = _pick_tile(HW, 512)
    kv, q = pl.pallas_call(
        _proj_kernel,
        out_shape=(jax.ShapeDtypeStruct((B, Ckv, HW), jnp.bfloat16),
                   jax.ShapeDtypeStruct((B, Cq, HW), jnp.bfloat16)),
        grid_spec=pltpu.PrefetchScalarGridSpec(
            num_scalar_prefetch=0,
            grid=(B, HW // tp),
            in_specs=[
                pl.BlockSpec((None, C, tp), lambda b, i: (b, 0, i)),   # x tile
                pl.BlockSpec((Ckv, C), lambda b, i: (0, 0)),           # [Wk^T; Wv^T; 0]
                pl.BlockSpec((Ckv, 1), lambda b, i: (0, 0)),           # [bk; bv; 1]
                pl.BlockSpec((Cq, C), lambda b, i: (0, 0)),            # Wq^T
                pl.BlockSpec((Cq, 1), lambda b, i: (0, 0)),            # bq
            ],
            out_specs=(
                pl.BlockSpec((None, Ckv, tp), lambda b, i: (b, 0, i)),
                pl.BlockSpec((None, Cq, tp), lambda b, i: (b, 0, i)),
            )),
        compiler_params=pltpu.CompilerParams(
            dimension_semantics=("parallel", "parallel"),
            vmem_limit_bytes=vmem_limit),
    )(x_cf, w_kv, b_kv, w_q, b_q)

    # ---- Pass 2: flash-style attention over (q-tile, kv-tile) blocks. ----
    attn_kernel = functools.partial(_attn_kernel, C=C, Cq=Cq, bf16_exp=bf16_exp)
    out_cf = pl.pallas_call(
        attn_kernel,
        out_shape=jax.ShapeDtypeStruct((B, C, HW), x_nchw.dtype),
        grid_spec=pltpu.PrefetchScalarGridSpec(
            num_scalar_prefetch=0,
            grid=(B, HW // tq, HW // tk),
            in_specs=[
                pl.BlockSpec((None, Cq, tq), lambda b, qi, ki: (b, 0, qi)),   # q tile
                pl.BlockSpec((None, Ckv, tk), lambda b, qi, ki: (b, 0, ki)),  # k/v/ones tile
                pl.BlockSpec((None, C, tq), lambda b, qi, ki: (b, 0, qi)),    # residual x
            ],
            out_specs=pl.BlockSpec((None, C, tq), lambda b, qi, ki: (b, 0, qi)),
            scratch_shapes=[pltpu.VMEM((C + 1, tq), jnp.float32),   # acc + denominator
                            pltpu.VMEM((1, tq), jnp.float32)]),     # running max
        compiler_params=pltpu.CompilerParams(
            # kv axis carries the accumulator scratch -> MUST be "arbitrary".
            dimension_semantics=("parallel", "parallel", "arbitrary"),
            vmem_limit_bytes=vmem_limit),
    )(q, kv, x_cf)

    return out_cf.reshape(B, C, H, W)


def _reference(x_nchw, wq, bq, wk, bk, wv, bv):
    """Pure-JAX reference mirroring the PyTorch forward exactly (NCHW)."""
    B, C, H, W = x_nchw.shape
    HW = H * W
    xf = x_nchw.reshape(B, C, HW).astype(jnp.float32)                 # (B, C, HW)
    q = jnp.einsum('bcs,cd->bds', xf, wq) + bq.T[None]                # (B, Cq, HW)
    k = jnp.einsum('bcs,cd->bds', xf, wk) + bk.T[None]
    v = jnp.einsum('bcs,cd->bds', xf, wv) + bv.T[None]
    attn = jax.nn.softmax(jnp.einsum('bds,bdt->bst', q, k), axis=-1)  # (B, HW, HW)
    out = jnp.einsum('bcj,bij->bci', v, attn)                         # (B, C, HW)
    return (out + xf).reshape(B, C, H, W).astype(x_nchw.dtype)


if __name__ == "__main__":
    key = jax.random.PRNGKey(0)
    B, C, H, W = 2, 8, 16, 16          # channels=8 -> query/key channels = 1
    Cq = C // 8

    k_x, k_wq, k_bq, k_wk, k_bk, k_wv, k_bv = jax.random.split(key, 7)
    x = jax.random.normal(k_x, (B, C, H, W), dtype=jnp.float32)

    # Parameters stored as (C_in, C_out); equivalent to Conv2d weight[:, :, 0, 0].T
    wq = 0.1 * jax.random.normal(k_wq, (C, Cq), dtype=jnp.float32)
    bq = 0.1 * jax.random.normal(k_bq, (1, Cq), dtype=jnp.float32)
    wk = 0.1 * jax.random.normal(k_wk, (C, Cq), dtype=jnp.float32)
    bk = 0.1 * jax.random.normal(k_bk, (1, Cq), dtype=jnp.float32)
    wv = 0.1 * jax.random.normal(k_wv, (C, C), dtype=jnp.float32)
    bv = 0.1 * jax.random.normal(k_bv, (1, C), dtype=jnp.float32)

    out = attention_module(x, wq, bq, wk, bk, wv, bv)
    out = jax.block_until_ready(out)

    ref = _reference(x, wq, bq, wk, bk, wv, bv)
    assert out.shape == (B, C, H, W)
    # bf16 projections / MXU operands + approx reciprocal -> loose tolerance.
    assert jnp.allclose(out, ref, atol=3e-2, rtol=3e-2), "mismatch vs reference"

    print("KERNEL_OK")
</pallas_src>

<mosaic_0001>
module attributes {stable_mosaic.version = 11 : i64} {
  func.func @_proj_kernel(%arg0: i32, %arg1: i32, %arg2: memref<1x8x256xf32, #tpu.memory_space<vmem>>, %arg3: memref<10x8xbf16, #tpu.memory_space<vmem>>, %arg4: memref<10x1xf32, #tpu.memory_space<vmem>>, %arg5: memref<1x8xbf16, #tpu.memory_space<vmem>>, %arg6: memref<1x1xf32, #tpu.memory_space<vmem>>, %arg7: memref<1x10x256xbf16, #tpu.memory_space<vmem>>, %arg8: memref<1x1x256xbf16, #tpu.memory_space<vmem>>) attributes {dimension_semantics = [#tpu.dimension_semantics<parallel>, #tpu.dimension_semantics<parallel>], iteration_bounds = array<i64: 2, 1>, scalar_prefetch = 0 : i64, scratch_operands = 0 : i64, tpu.core_type = #tpu.core_type<tc>, window_params = [{transform_indices = @transform_0, window_bounds = array<i64: 1, 8, 256>}, {pipeline_mode = #tpu.pipeline_mode<synchronous>, transform_indices = @transform_1, window_bounds = array<i64: 10, 8>}, {pipeline_mode = #tpu.pipeline_mode<synchronous>, transform_indices = @transform_2, window_bounds = array<i64: 10, 1>}, {pipeline_mode = #tpu.pipeline_mode<synchronous>, transform_indices = @transform_3, window_bounds = array<i64: 1, 8>}, {pipeline_mode = #tpu.pipeline_mode<synchronous>, transform_indices = @transform_4, window_bounds = array<i64: 1, 1>}, {transform_indices = @transform_5, window_bounds = array<i64: 1, 10, 256>}, {transform_indices = @transform_6, window_bounds = array<i64: 1, 1, 256>}]} {
    %c0 = arith.constant 0 : index
    %c0_0 = arith.constant 0 : index
    %c0_1 = arith.constant 0 : index
    %0 = vector.load %arg2[%c0, %c0_0, %c0_1] : memref<1x8x256xf32, #tpu.memory_space<vmem>>, vector<1x8x256xf32>
    %1 = vector.shape_cast %0 : vector<1x8x256xf32> to vector<8x256xf32>
    %2 = arith.truncf %1 : vector<8x256xf32> to vector<8x256xbf16>
    %c0_2 = arith.constant 0 : index
    %c0_3 = arith.constant 0 : index
    %3 = vector.load %arg3[%c0_2, %c0_3] : memref<10x8xbf16, #tpu.memory_space<vmem>>, vector<10x8xbf16>
    %cst = arith.constant dense<0.000000e+00> : vector<10x256xf32>
    %4 = tpu.matmul %3, %2, %cst {dimension_numbers = #tpu.dot_dimension_numbers<[1], [0], [0], [1], [0, 0, 1, 1], [], []>} : vector<10x8xbf16>, vector<8x256xbf16>, vector<10x256xf32> -> vector<10x256xf32>
    %c0_4 = arith.constant 0 : index
    %c0_5 = arith.constant 0 : index
    %5 = vector.load %arg4[%c0_4, %c0_5] : memref<10x1xf32, #tpu.memory_space<vmem>>, vector<10x1xf32>
    %6 = vector.broadcast %5 : vector<10x1xf32> to vector<10x256xf32>
    %7 = arith.addf %4, %6 : vector<10x256xf32>
    %c0_6 = arith.constant 0 : index
    %c0_7 = arith.constant 0 : index
    %8 = vector.load %arg5[%c0_6, %c0_7] : memref<1x8xbf16, #tpu.memory_space<vmem>>, vector<1x8xbf16>
    %cst_8 = arith.constant dense<0.000000e+00> : vector<1x256xf32>
    %9 = tpu.matmul %8, %2, %cst_8 {dimension_numbers = #tpu.dot_dimension_numbers<[1], [0], [0], [1], [0, 0, 1, 1], [], []>} : vector<1x8xbf16>, vector<8x256xbf16>, vector<1x256xf32> -> vector<1x256xf32>
    %c0_9 = arith.constant 0 : index
    %c0_10 = arith.constant 0 : index
    %10 = vector.load %arg6[%c0_9, %c0_10] : memref<1x1xf32, #tpu.memory_space<vmem>>, vector<1x1xf32>
    %11 = vector.broadcast %10 : vector<1x1xf32> to vector<1x256xf32>
    %12 = arith.addf %9, %11 : vector<1x256xf32>
    %13 = arith.truncf %7 : vector<10x256xf32> to vector<10x256xbf16>
    %c0_11 = arith.constant 0 : index
    %c0_12 = arith.constant 0 : index
    %c0_13 = arith.constant 0 : index
    %14 = vector.load %arg7[%c0_11, %c0_12, %c0_13] : memref<1x10x256xbf16, #tpu.memory_space<vmem>>, vector<1x10x256xbf16>
    %15 = vector.shape_cast %14 : vector<1x10x256xbf16> to vector<10x256xbf16>
    %16 = vector.shape_cast %13 : vector<10x256xbf16> to vector<1x10x256xbf16>
    tpu.vector_store %arg7[%c0_11, %c0_12, %c0_13], %16 {strides = array<i32>} : memref<1x10x256xbf16, #tpu.memory_space<vmem>>, vector<1x10x256xbf16>,
    %17 = arith.truncf %12 : vector<1x256xf32> to vector<1x256xbf16>
    %c0_14 = arith.constant 0 : index
    %c0_15 = arith.constant 0 : index
    %c0_16 = arith.constant 0 : index
    %18 = vector.load %arg8[%c0_14, %c0_15, %c0_16] : memref<1x1x256xbf16, #tpu.memory_space<vmem>>, vector<1x1x256xbf16>
    %19 = vector.shape_cast %18 : vector<1x1x256xbf16> to vector<1x256xbf16>
    %20 = vector.shape_cast %17 : vector<1x256xbf16> to vector<1x1x256xbf16>
    tpu.vector_store %arg8[%c0_14, %c0_15, %c0_16], %20 {strides = array<i32>} : memref<1x1x256xbf16, #tpu.memory_space<vmem>>, vector<1x1x256xbf16>,
    return
  }
  func.func @transform_0(%arg0: i32, %arg1: i32) -> (i32, i32, i32) {
    %c0_i32 = arith.constant 0 : i32
    %c0_i32_0 = arith.constant 0 : i32
    return %arg0, %c0_i32, %arg1 : i32, i32, i32
  }
  func.func @transform_1(%arg0: i32, %arg1: i32) -> (i32, i32) {
    %c0_i32 = arith.constant 0 : i32
    %c0_i32_0 = arith.constant 0 : i32
    %c0_i32_1 = arith.constant 0 : i32
    return %c0_i32, %c0_i32_0 : i32, i32
  }
  func.func @transform_2(%arg0: i32, %arg1: i32) -> (i32, i32) {
    %c0_i32 = arith.constant 0 : i32
    %c0_i32_0 = arith.constant 0 : i32
    %c0_i32_1 = arith.constant 0 : i32
    return %c0_i32, %c0_i32_0 : i32, i32
  }
  func.func @transform_3(%arg0: i32, %arg1: i32) -> (i32, i32) {
    %c0_i32 = arith.constant 0 : i32
    %c0_i32_0 = arith.constant 0 : i32
    %c0_i32_1 = arith.constant 0 : i32
    return %c0_i32, %c0_i32_0 : i32, i32
  }
  func.func @transform_4(%arg0: i32, %arg1: i32) -> (i32, i32) {
    %c0_i32 = arith.constant 0 : i32
    %c0_i32_0 = arith.constant 0 : i32
    %c0_i32_1 = arith.constant 0 : i32
    return %c0_i32, %c0_i32_0 : i32, i32
  }
  func.func @transform_5(%arg0: i32, %arg1: i32) -> (i32, i32, i32) {
    %c0_i32 = arith.constant 0 : i32
    %c0_i32_0 = arith.constant 0 : i32
    return %arg0, %c0_i32, %arg1 : i32, i32, i32
  }
  func.func @transform_6(%arg0: i32, %arg1: i32) -> (i32, i32, i32) {
    %c0_i32 = arith.constant 0 : i32
    %c0_i32_0 = arith.constant 0 : i32
    return %arg0, %c0_i32, %arg1 : i32, i32, i32
  }
}

</mosaic_0001>

<llo_original>
// kernel: tpu_custom_call.1
$region0: #{tpu_custom_call.1}
  #allocation0 [shape = 'u32[]', space=smem, size = 0x4, offset = 0x4, fixed_abs, tag = 'smem constant byte address 0x4 - core index']
  #allocation1 [shape = 'u32[72,128]{1,0:T(1,128)}', space=vmem, size = 0x9000, scoped, tag = 'internal scratch']
  #allocation2 [shape = 'f32[1,1]{1,0:T(1,128)S(1)}', space=vmem, size = 0x200, scoped, tag = 'scoped memory for tpu_custom_call.1']
  %s0 = inlined_call_operand.hbm [shape: f32[2,8,256], index: 0, kind: input, shape index: {}]
  %s1 = inlined_call_operand.vmem [shape: bf16[10,8], index: 1, kind: input, shape index: {}]
  %s2 = inlined_call_operand.vmem [shape: f32[10,1], index: 2, kind: input, shape index: {}]
  %s3 = inlined_call_operand.vmem [shape: bf16[1,8], index: 3, kind: input, shape index: {}]
  %s4 = inlined_call_operand.<no memory space> [shape: f32[1,1], index: 4, kind: input, shape index: {}]
  %s5 = inlined_call_operand.vmem [shape: bf16[2,10,256], index: 5, kind: output, shape index: {0}]
  %s6 = inlined_call_operand.vmem [shape: bf16[2,1,256], index: 6, kind: output, shape index: {1}]
  %7 = xla_tuple %s5, %s6
  %s8 = sld [smem:[#allocation0]]
  $region65: #{tpu_custom_call.1} parent=0
    _
  %s10 = ssub.s32 1, %s8
  %s11 = scalar_select 0, %s10, %s8
  %v12 = vstv %s4
  %13 = vst [vmem:[#allocation2] sm:$0x1] %v12
  $region1: #{tpu_custom_call.1} parent=0
    #allocation3 [shape = 'u8[16384]{0}', space=vmem, size = 0x4000, scoped, tag = 'input window, operand 0']
    #allocation4 [shape = 's32[2]{0}', space=sflag, size = 0x8, scoped, tag = 'scoped memory for tpu_custom_call.1']
    %14 = vsyncpa [#allocation4], 0
    %s15 = scalar_lea.sflag [#allocation4], 1
    %16 = vsyncpa %s15, 0
    loop: start=0, step=1, limit=4
    $region2: #{tpu_custom_call.1} parent=1 // loop_pre_header
      _
    $region3: #{tpu_custom_call.1} parent=1 // loop_header
      %s18 = sphi 0, %s22
      %p19 = scmp.ge.s32.totalorder %s18, 4
      %s25 = sphi 0, %s37
      %s26 = sphi 0, %s33
      %s27 = sphi 0, %s25
      %s28 = sphi 0, %s26
      %s29 = sphi 0, %s27
      %s30 = sphi 0, %s28
      %s42 = sphi 0, %s44
      %s45 = sphi 0, %s42
      %s46 = sphi 0, %s45
      %s62 = sphi 0, %s46
      %s66 = sphi 0, %s66
      %s68 = sphi 0, %s66
      %s69 = sphi 0, %s68
      %s83 = sphi 0, %s69
      %s87 = sphi 0, %s87
      %s89 = sphi 0, %s87
      %s90 = sphi 0, %s89
      %s104 = sphi 0, %s90
      %s108 = sphi 0, %s108
      %s110 = sphi 0, %s108
      %s111 = sphi 0, %s110
      %s125 = sphi 0, %s111
      %s129 = sphi 0, %s129
      %s131 = sphi 0, %s129
      %s132 = sphi 0, %s131
      %s146 = sphi 0, %s132
      %s154 = sphi 0, %s156
      %s157 = sphi 0, %s154
      %s158 = sphi 0, %s157
      %s174 = sphi 0, %s158
      %s182 = sphi 0, %s184
      %s185 = sphi 0, %s182
      %s186 = sphi 0, %s185
      %s202 = sphi 0, %s186
    $region4: #{tpu_custom_call.1} parent=1 // loop_header_branch
      %21 = sbr.rel (%p19) target = $region8
    $region5: #{tpu_custom_call.1} parent=1 // loop_body
      %s23 = ssub.s32 %s18, 1
      %s24 = ssub.s32 %s18, 2
      %s31 = sadd.s32 1, %s26
      %p32 = scmp.ge.s32.totalorder %s31, 1
      %s33 = scalar_select %p32, 0, %s31
      %s34 = sadd.s32 1, %s25
      %s35 = scalar_select %p32, %s34, %s25
      %p36 = scmp.ge.s32.totalorder %s35, 2
      %s37 = scalar_select %p36, 0, %s35
      %s38 = ssub.s32 %s25, %s37
      %s39 = ssub.s32 %s26, %s33
      %s40 = sor.u32 %s38, %s39
      %p41 = scmp.eq.s32.totalorder %s40, 0
      %s43 = sadd.s32 %s42, 1
      %s44 = scalar_select %p41, %s42, %s43
      %p47 = pneg %p41
      %p48 = scmp.eq.s32.totalorder %s18, 1
      %p49 = por %p47, %p48
      %p50 = scmp.ne.s32.totalorder %s42, %s45
      %p51 = scmp.eq.s32.totalorder %s18, 0
      %p52 = por %p50, %p51
      %p53 = scmp.ne.s32.totalorder %s42, %s45
      %p54 = scmp.eq.s32.totalorder %s23, 1
      %p55 = por %p53, %p54
      %p56 = scmp.ne.s32.totalorder %s45, %s46
      %p57 = scmp.eq.s32.totalorder %s23, 0
      %p58 = por %p56, %p57
      %p59 = scmp.ne.s32.totalorder %s45, %s46
      %p60 = scmp.eq.s32.totalorder %s24, 1
      %p61 = por %p59, %p60
      %p63 = scmp.ne.s32.totalorder %s46, %s62
      %p64 = scmp.eq.s32.totalorder %s24, 0
      %p65 = por %p63, %p64
      %s67 = sadd.s32 %s66, 1
      %p70 = scmp.eq.s32.totalorder %s18, 1
      %p71 = scmp.ne.s32.totalorder %s66, %s68
      %p72 = scmp.eq.s32.totalorder %s18, 0
      %p73 = por %p71, %p72
      %p74 = scmp.ne.s32.totalorder %s66, %s68
      %p75 = scmp.eq.s32.totalorder %s23, 1
      %p76 = por %p74, %p75
      %p77 = scmp.ne.s32.totalorder %s68, %s69
      %p78 = scmp.eq.s32.totalorder %s23, 0
      %p79 = por %p77, %p78
      %p80 = scmp.ne.s32.totalorder %s68, %s69
      %p81 = scmp.eq.s32.totalorder %s24, 1
      %p82 = por %p80, %p81
      %p84 = scmp.ne.s32.totalorder %s69, %s83
      %p85 = scmp.eq.s32.totalorder %s24, 0
      %p86 = por %p84, %p85
      %s88 = sadd.s32 %s87, 1
      %p91 = scmp.eq.s32.totalorder %s18, 1
      %p92 = scmp.ne.s32.totalorder %s87, %s89
      %p93 = scmp.eq.s32.totalorder %s18, 0
      %p94 = por %p92, %p93
      %p95 = scmp.ne.s32.totalorder %s87, %s89
      %p96 = scmp.eq.s32.totalorder %s23, 1
      %p97 = por %p95, %p96
      %p98 = scmp.ne.s32.totalorder %s89, %s90
      %p99 = scmp.eq.s32.totalorder %s23, 0
      %p100 = por %p98, %p99
      %p101 = scmp.ne.s32.totalorder %s89, %s90
      %p102 = scmp.eq.s32.totalorder %s24, 1
      %p103 = por %p101, %p102
      %p105 = scmp.ne.s32.totalorder %s90, %s104
      %p106 = scmp.eq.s32.totalorder %s24, 0
      %p107 = por %p105, %p106
      %s109 = sadd.s32 %s108, 1
      %p112 = scmp.eq.s32.totalorder %s18, 1
      %p113 = scmp.ne.s32.totalorder %s108, %s110
      %p114 = scmp.eq.s32.totalorder %s18, 0
      %p115 = por %p113, %p114
      %p116 = scmp.ne.s32.totalorder %s108, %s110
      %p117 = scmp.eq.s32.totalorder %s23, 1
      %p118 = por %p116, %p117
      %p119 = scmp.ne.s32.totalorder %s110, %s111
      %p120 = scmp.eq.s32.totalorder %s23, 0
      %p121 = por %p119, %p120
      %p122 = scmp.ne.s32.totalorder %s110, %s111
      %p123 = scmp.eq.s32.totalorder %s24, 1
      %p124 = por %p122, %p123
      %p126 = scmp.ne.s32.totalorder %s111, %s125
      %p127 = scmp.eq.s32.totalorder %s24, 0
      %p128 = por %p126, %p127
      %s130 = sadd.s32 %s129, 1
      %p133 = scmp.eq.s32.totalorder %s18, 1
      %p134 = scmp.ne.s32.totalorder %s129, %s131
      %p135 = scmp.eq.s32.totalorder %s18, 0
      %p136 = por %p134, %p135
      %p137 = scmp.ne.s32.totalorder %s129, %s131
      %p138 = scmp.eq.s32.totalorder %s23, 1
      %p139 = por %p137, %p138
      %p140 = scmp.ne.s32.totalorder %s131, %s132
      %p141 = scmp.eq.s32.totalorder %s23, 0
      %p142 = por %p140, %p141
      %p143 = scmp.ne.s32.totalorder %s131, %s132
      %p144 = scmp.eq.s32.totalorder %s24, 1
      %p145 = por %p143, %p144
      %p147 = scmp.ne.s32.totalorder %s132, %s146
      %p148 = scmp.eq.s32.totalorder %s24, 0
      %p149 = por %p147, %p148
      %s150 = ssub.s32 %s25, %s37
      %s151 = ssub.s32 %s26, %s33
      %s152 = sor.u32 %s150, %s151
      %p153 = scmp.eq.s32.totalorder %s152, 0
      %s155 = sadd.s32 %s154, 1
      %s156 = scalar_select %p153, %s154, %s155
      %p159 = pneg %p153
      %p160 = scmp.eq.s32.totalorder %s18, 1
      %p161 = por %p159, %p160
      %p162 = scmp.ne.s32.totalorder %s154, %s157
      %p163 = scmp.eq.s32.totalorder %s18, 0
      %p164 = por %p162, %p163
      %p165 = scmp.ne.s32.totalorder %s154, %s157
      %p166 = scmp.eq.s32.totalorder %s23, 1
      %p167 = por %p165, %p166
      %p168 = scmp.ne.s32.totalorder %s157, %s158
      %p169 = scmp.eq.s32.totalorder %s23, 0
      %p170 = por %p168, %p169
      %p171 = scmp.ne.s32.totalorder %s157, %s158
      %p172 = scmp.eq.s32.totalorder %s24, 1
      %p173 = por %p171, %p172
      %p175 = scmp.ne.s32.totalorder %s158, %s174
      %p176 = scmp.eq.s32.totalorder %s24, 0
      %p177 = por %p175, %p176
      %s178 = ssub.s32 %s25, %s37
      %s179 = ssub.s32 %s26, %s33
      %s180 = sor.u32 %s178, %s179
      %p181 = scmp.eq.s32.totalorder %s180, 0
      %s183 = sadd.s32 %s182, 1
      %s184 = scalar_select %p181, %s182, %s183
      %p187 = pneg %p181
      %p188 = scmp.eq.s32.totalorder %s18, 1
      %p189 = por %p187, %p188
      %p190 = scmp.ne.s32.totalorder %s182, %s185
      %p191 = scmp.eq.s32.totalorder %s18, 0
      %p192 = por %p190, %p191
      %p193 = scmp.ne.s32.totalorder %s182, %s185
      %p194 = scmp.eq.s32.totalorder %s23, 1
      %p195 = por %p193, %p194
      %p196 = scmp.ne.s32.totalorder %s185, %s186
      %p197 = scmp.eq.s32.totalorder %s23, 0
      %p198 = por %p196, %p197
      %p199 = scmp.ne.s32.totalorder %s185, %s186
      %p200 = scmp.eq.s32.totalorder %s24, 1
      %p201 = por %p199, %p200
      %p203 = scmp.ne.s32.totalorder %s186, %s202
      %p204 = scmp.eq.s32.totalorder %s24, 0
      %p205 = por %p203, %p204
      %p206 = scmp.le.s32.totalorder 1, %s18
      %p207 = scmp.lt.s32.totalorder %s18, 3
      %p208 = pnand %p206, %p207
      %p209 = pneg %p208
      // Predicated region
      $region9: #{tpu_custom_call.1} parent=5 // pred_check
        _
      $region10: #{tpu_custom_call.1} parent=5 // pred_check_branch
        %211 = sbr.rel (%p208) target = $region12
      $region11: #{tpu_custom_call.1} parent=5 // pred_region
        %s212 = ssub.s32 %s18, 1
        // Predicated region
        $region13: #{tpu_custom_call.1} parent=11 // pred_check
          %p213 = pneg %p79
        $region14: #{tpu_custom_call.1} parent=11 // pred_check_branch
          %215 = sbr.rel (%p213) target = $region16
        $region15: #{tpu_custom_call.1} parent=11 // pred_region
          _
        $region16: #{tpu_custom_call.1} parent=11 // pred_fallthru
          _
        // Predicated region
        $region17: #{tpu_custom_call.1} parent=11 // pred_check
          %p216 = pneg %p100
        $region18: #{tpu_custom_call.1} parent=11 // pred_check_branch
          %218 = sbr.rel (%p216) target = $region20
        $region19: #{tpu_custom_call.1} parent=11 // pred_region
          _
        $region20: #{tpu_custom_call.1} parent=11 // pred_fallthru
          _
        // Predicated region
        $region21: #{tpu_custom_call.1} parent=11 // pred_check
          %p219 = pneg %p121
        $region22: #{tpu_custom_call.1} parent=11 // pred_check_branch
          %221 = sbr.rel (%p219) target = $region24
        $region23: #{tpu_custom_call.1} parent=11 // pred_region
          _
        $region24: #{tpu_custom_call.1} parent=11 // pred_fallthru
          _
        // Predicated region
        $region25: #{tpu_custom_call.1} parent=11 // pred_check
          %p222 = pneg %p142
        $region26: #{tpu_custom_call.1} parent=11 // pred_check_branch
          %224 = sbr.rel (%p222) target = $region28
        $region27: #{tpu_custom_call.1} parent=11 // pred_region
          _
        $region28: #{tpu_custom_call.1} parent=11 // pred_fallthru
          _
      $region12: #{tpu_custom_call.1} parent=5 // pred_fallthru
        _
      %p225 = scmp.lt.s32.totalorder %s18, 2
      // Predicated region
      $region29: #{tpu_custom_call.1} parent=5 // pred_check
        %p226 = pneg %p225
      $region30: #{tpu_custom_call.1} parent=5 // pred_check_branch
        %228 = sbr.rel (%p226) target = $region32
      $region31: #{tpu_custom_call.1} parent=5 // pred_region
        // Predicated region
        $region33: #{tpu_custom_call.1} parent=31 // pred_check
          %p229 = pneg %p52
        $region34: #{tpu_custom_call.1} parent=31 // pred_check_branch
          %231 = sbr.rel (%p229) target = $region36
        $region35: #{tpu_custom_call.1} parent=31 // pred_region
          %s232 = sand.u32 %s42, 1
          %s233 = scalar_lea.sflag [#allocation4], %s232
          %s234 = sand.u32 %s42, 1
          %s235 = smul.addr %s234, 16
          %s236 = scalar_lea.vmem [#allocation3], %s235
          %s237 = smul.u32 2, %s26
          %239 = vsyncadd %s233, 0
          %s240 = smul.addr %s25, 2
          %s241 = sadd.s32 %s237, %s240
          %s242 = smul.addr %s241, 8
          %s243 = scalar_lea.hbm %s0, %s242
          %s245 = sshll.u32 %s243, 4
          %s246 = int_to_ptr.hbm [resolvable:$true] %s245
          %s247 = sshll.u32 %s236, 4
          %s248 = int_to_ptr.vmem [resolvable:$true] %s247
          %250 = dma.hbm_to_vmem [thread:$0]  %s246, 256, %s248, %s233
        $region36: #{tpu_custom_call.1} parent=31 // pred_fallthru
          _
      $region32: #{tpu_custom_call.1} parent=5 // pred_fallthru
        _
      %p251 = scmp.le.s32.totalorder 1, %s18
      %p252 = scmp.lt.s32.totalorder %s18, 3
      %p253 = pnand %p251, %p252
      %p254 = pneg %p253
      // Predicated region
      $region37: #{tpu_custom_call.1} parent=5 // pred_check
        _
      $region38: #{tpu_custom_call.1} parent=5 // pred_check_branch
        %256 = sbr.rel (%p253) target = $region40
      $region39: #{tpu_custom_call.1} parent=5 // pred_region
        %s257 = ssub.s32 %s18, 1
        %s258 = sand.u32 %s45, 1
        %s259 = scalar_lea.sflag [#allocation4], %s258
        %s260 = sand.u32 %s45, 1
        %s261 = smul.addr %s260, 16
        %s262 = scalar_lea.vmem [#allocation3], %s261
        // Predicated region
        $region41: #{tpu_custom_call.1} parent=39 // pred_check
          %p263 = pneg %p58
        $region42: #{tpu_custom_call.1} parent=39 // pred_check_branch
          %265 = sbr.rel (%p263) target = $region44
        $region43: #{tpu_custom_call.1} parent=39 // pred_region
          %267 = dma.done %s259, 256
        $region44: #{tpu_custom_call.1} parent=39 // pred_fallthru
          _
        %s268 = sand.u32 %s45, 1
        %s269 = scalar_lea.sflag [#allocation4], %s268
        %s270 = sand.u32 %s45, 1
        %s271 = smul.addr %s270, 16
        %s272 = scalar_lea.vmem [#allocation3], %s271
        %p273 = pneg %p58
        %p274 = pneg %p55
        %p275 = pneg %p79
        %p276 = pneg %p76
        %p277 = pneg %p100
        %p278 = pneg %p97
        %p279 = pneg %p121
        %p280 = pneg %p118
        %p281 = pneg %p142
        %p282 = pneg %p139
        %p283 = pneg %p170
        %p284 = pneg %p167
        %s285 = smul.u32 2, %s28
        %p286 = scmp.lt.s32.totalorder %s27, 1
        %s287 = scalar_select %p286, %s27, 1
        %p288 = scmp.lt.s32.totalorder %s285, 1
        %s289 = scalar_select %p288, %s285, 1
        %s290 = smul.addr %s287, 4
        %s291 = sadd.s32 %s289, %s290
        %s292 = smul.addr %s291, 4
        %s293 = scalar_lea.vmem %s5, %s292
        %p294 = pneg %p198
        %p295 = pneg %p195
        %s296 = smul.u32 2, %s28
        %p297 = scmp.lt.s32.totalorder %s27, 1
        %s298 = scalar_select %p297, %s27, 1
        %p299 = scmp.lt.s32.totalorder %s296, 1
        %s300 = scalar_select %p299, %s296, 1
        %s301 = smul.addr %s298, 2
        %s302 = sadd.s32 %s300, %s301
        %s303 = scalar_lea.vmem %s6, %s302
        %s304 = smul.u32 2, %s28
        %s305 = smul.u32 2, %s28
        %p306 = scmp.lt.s32.totalorder %s27, 1
        %s307 = scalar_select %p306, %s27, 1
        %p308 = scmp.lt.s32.totalorder %s305, 1
        %s309 = scalar_select %p308, %s305, 1
        %s310 = smul.addr %s307, 4
        %s311 = sadd.s32 %s309, %s310
        %s312 = smul.addr %s311, 4
        %s313 = scalar_lea.vmem %s5, %s312
        %s314 = smul.u32 2, %s28
        %s315 = smul.u32 2, %s28
        %p316 = scmp.lt.s32.totalorder %s27, 1
        %s317 = scalar_select %p316, %s27, 1
        %p318 = scmp.lt.s32.totalorder %s315, 1
        %s319 = scalar_select %p318, %s315, 1
        %s320 = smul.addr %s317, 2
        %s321 = sadd.s32 %s319, %s320
        %s322 = scalar_lea.vmem %s6, %s321
        %s323 = smul.u32 2, %s28
        %v325 = vld [vmem:[%s262] sm:$0xff]
        %v326 = vld [vmem:[%s262 + $0x8] sm:$0xff]
        %v327 = vpack.c.bf16 %v325, %v325
        %v328 = vpack.c.bf16 %v326, %v326
        %v329 = vld [vmem:[%s1] sm:$0xf]
        %v330 = vld [vmem:[%s1 + $0x4] sm:$0x1]
        %v331 = vld [vmem:[%s2] sm:$0xff]
        %v332 = vld [vmem:[%s2 + $0x8] sm:$0x3]
        %334 = vset.pattern.permute.xlu0 0
        %335 = vperm.xlu0 %334, %v331
        %v336 = vpop.permute.xlu0 %335
        %339 = vset.pattern.permute.xlu0 0
        %340 = vperm.xlu0 %339, %v332
        %v341 = vpop.permute.xlu0 %340
        %v345 = vunpack.c.l.b16 %v329
        %v346 = vunpack.c.l.b16 %v330
        %v347 = vpack.c.b16 %v346, %v345
        %vm348 = vcmask 64512
        %v350 = vsel %vm348, %v347, 0
        %vm352 = vcmask 1043456
        %v354 = vsel %vm352, %v327, 0
        %v357 = vsel %vm352, %v328, 0
        %359 = vmatpush.bf16.msra.mxu0 0
        %360 = vmatpush.bf16.msra.mxu0 0
        %361 = vmatpush.bf16.msra.mxu0 0
        %362 = vmatpush.bf16.msra.mxu0 0
        %363 = vmatpush.bf16.msra.mxu0 0
        %364 = vmatpush.bf16.msra.mxu0 0
        %365 = vmatpush.bf16.msra.mxu0 0
        %366 = vmatpush.bf16.msra.mxu0 %v354
        %367 = vmatmul.bf16.gmra.mxu0 %v350
        %v368 = vpop.f32.mrf.mxu0
        %v369 = vadd.f32 %v336, %v368
        %v370 = vpop.f32.mrf.mxu0
        %v371 = vadd.f32 %v341, %v370
        %372 = vdwg.mxu0
        %373 = vmatpush.bf16.msra.mxu0 0
        %374 = vmatpush.bf16.msra.mxu0 0
        %375 = vmatpush.bf16.msra.mxu0 0
        %376 = vmatpush.bf16.msra.mxu0 0
        %377 = vmatpush.bf16.msra.mxu0 0
        %378 = vmatpush.bf16.msra.mxu0 0
        %379 = vmatpush.bf16.msra.mxu0 0
        %380 = vmatpush.bf16.msra.mxu0 %v357
        %381 = vmatmul.bf16.gmra.mxu0 %v350
        %v382 = vpop.f32.mrf.mxu0
        %v383 = vadd.f32 %v336, %v382
        %v384 = vpop.f32.mrf.mxu0
        %v385 = vadd.f32 %v341, %v384
        %386 = vdwg.mxu0
        %v387 = vld [vmem:[%s3] sm:$0x1]
        %v388 = vld [vmem:[#allocation2] sm:$0x1]
        %390 = vset.pattern.permute.xlu0 0
        %391 = vperm.xlu0 %390, %v388
        %v392 = vpop.permute.xlu0 %391
        %v394 = vperm.slane %v392, 0
        %v396 = vsel %vm348, %v387, 0
        %398 = vmatpush.bf16.msra.mxu0 0
        %399 = vmatpush.bf16.msra.mxu0 0
        %400 = vmatpush.bf16.msra.mxu0 0
        %401 = vmatpush.bf16.msra.mxu0 0
        %402 = vmatpush.bf16.msra.mxu0 0
        %403 = vmatpush.bf16.msra.mxu0 0
        %404 = vmatpush.bf16.msra.mxu0 0
        %405 = vmatpush.bf16.msra.mxu0 %v354
        %406 = vmatmul.bf16.gmra.mxu0 %v396
        %v407 = vpop.f32.mrf.mxu0
        %v408 = vadd.f32 %v394, %v407
        %v409 = vpop.f32.mrf.mxu0
        %410 = vdwg.mxu0
        %411 = vmatpush.bf16.msra.mxu0 0
        %412 = vmatpush.bf16.msra.mxu0 0
        %413 = vmatpush.bf16.msra.mxu0 0
        %414 = vmatpush.bf16.msra.mxu0 0
        %415 = vmatpush.bf16.msra.mxu0 0
        %416 = vmatpush.bf16.msra.mxu0 0
        %417 = vmatpush.bf16.msra.mxu0 0
        %418 = vmatpush.bf16.msra.mxu0 %v357
        %419 = vmatmul.bf16.gmra.mxu0 %v396
        %v420 = vpop.f32.mrf.mxu0
        %v421 = vadd.f32 %v394, %v420
        %v422 = vpop.f32.mrf.mxu0
        %423 = vdwg.mxu0
        %v424 = vpack.c.bf16 %v383, %v369
        %v425 = vpack.c.bf16 %v385, %v371
        %426 = vst [vmem:[%s313] sm:$0xff] %v424
        %427 = vst [vmem:[%s313 + $0x8] sm:$0x11] %v425
        %v428 = vpack.c.bf16 %v421, %v408
        %v430 = vrot.slane %v428, 3
        %vm431 = vcmask 1040384
        %v434 = vsel %vm431, %v428, %v430
        %vm436 = vcmask 1040384
        %vm437 = vsmask.f32 256
        %vm438 = vmand %vm436, %vm437
        %vm439 = vcmask 1041409
        %vm440 = vsmask.f32 1280
        %vm441 = vmand %vm439, %vm440
        %vm442 = vmor %vm441, %vm438
        %v443 = vld [vmem:[%s322] sm:$0x3]
        %v444 = vsel %vm442, %v434, %v443
        %445 = vst [vmem:[%s322] sm:$0x3] %v444
        %s446 = smul.u32 2, %s28
        %p447 = scmp.lt.s32.totalorder %s27, 1
        %s448 = scalar_select %p447, %s27, 1
        %p449 = scmp.lt.s32.totalorder %s446, 1
        %s450 = scalar_select %p449, %s446, 1
        %s451 = smul.addr %s448, 4
        %s452 = sadd.s32 %s450, %s451
        %s453 = smul.addr %s452, 4
        %s454 = scalar_lea.vmem %s5, %s453
        %s455 = smul.u32 2, %s28
        %p456 = scmp.lt.s32.totalorder %s27, 1
        %s457 = scalar_select %p456, %s27, 1
        %p458 = scmp.lt.s32.totalorder %s455, 1
        %s459 = scalar_select %p458, %s455, 1
        %s460 = smul.addr %s457, 2
        %s461 = sadd.s32 %s459, %s460
        %s462 = scalar_lea.vmem %s6, %s461
        // Predicated region
        $region45: #{tpu_custom_call.1} parent=39 // pred_check
          %p463 = pneg %p167
        $region46: #{tpu_custom_call.1} parent=39 // pred_check_branch
          %465 = sbr.rel (%p463) target = $region48
        $region47: #{tpu_custom_call.1} parent=39 // pred_region
          %s466 = smul.u32 2, %s28
        $region48: #{tpu_custom_call.1} parent=39 // pred_fallthru
          _
        // Predicated region
        $region49: #{tpu_custom_call.1} parent=39 // pred_check
          %p467 = pneg %p195
        $region50: #{tpu_custom_call.1} parent=39 // pred_check_branch
          %469 = sbr.rel (%p467) target = $region52
        $region51: #{tpu_custom_call.1} parent=39 // pred_region
          %s470 = smul.u32 2, %s28
        $region52: #{tpu_custom_call.1} parent=39 // pred_fallthru
          _
      $region40: #{tpu_custom_call.1} parent=5 // pred_fallthru
        _
      %p471 = scmp.le.s32.totalorder 2, %s18
      // Predicated region
      $region53: #{tpu_custom_call.1} parent=5 // pred_check
        %p472 = pneg %p471
      $region54: #{tpu_custom_call.1} parent=5 // pred_check_branch
        %474 = sbr.rel (%p472) target = $region56
      $region55: #{tpu_custom_call.1} parent=5 // pred_region
        %s475 = ssub.s32 %s18, 2
        // Predicated region
        $region57: #{tpu_custom_call.1} parent=55 // pred_check
          %p476 = pneg %p173
        $region58: #{tpu_custom_call.1} parent=55 // pred_check_branch
          %478 = sbr.rel (%p476) target = $region60
        $region59: #{tpu_custom_call.1} parent=55 // pred_region
          %s479 = smul.u32 2, %s30
          %p480 = scmp.lt.s32.totalorder %s29, 1
          %s481 = scalar_select %p480, %s29, 1
          %p482 = scmp.lt.s32.totalorder %s479, 1
          %s483 = scalar_select %p482, %s479, 1
          %s484 = smul.addr %s481, 4
          %s485 = sadd.s32 %s483, %s484
          %s486 = smul.addr %s485, 4
          %s487 = scalar_lea.vmem %s5, %s486
        $region60: #{tpu_custom_call.1} parent=55 // pred_fallthru
          _
        // Predicated region
        $region61: #{tpu_custom_call.1} parent=55 // pred_check
          %p488 = pneg %p201
        $region62: #{tpu_custom_call.1} parent=55 // pred_check_branch
          %490 = sbr.rel (%p488) target = $region64
        $region63: #{tpu_custom_call.1} parent=55 // pred_region
          %s491 = smul.u32 2, %s30
          %p492 = scmp.lt.s32.totalorder %s29, 1
          %s493 = scalar_select %p492, %s29, 1
          %p494 = scmp.lt.s32.totalorder %s491, 1
          %s495 = scalar_select %p494, %s491, 1
          %s496 = smul.addr %s493, 2
          %s497 = sadd.s32 %s495, %s496
          %s498 = scalar_lea.vmem %s6, %s497
        $region64: #{tpu_custom_call.1} parent=55 // pred_fallthru
          _
      $region56: #{tpu_custom_call.1} parent=5 // pred_fallthru
        _
    $region6: #{tpu_custom_call.1} parent=1 // loop_footer
      %s22 = sadd.s32 1, %s18
    $region7: #{tpu_custom_call.1} parent=1 // loop_footer_branch
      %17 = sbr.rel target = $region3
    $region8: #{tpu_custom_call.1} parent=1 // loop_exit
      _
    %499 = vsyncpa [#allocation4], 1
    %s500 = scalar_lea.sflag [#allocation4], 1
    %501 = vsyncpa %s500, 1

</llo_original>
